<compile_context>
chip_gen: v7x
topology: tpu7x:2x2x1
jax: 0.10.0
libtpu: 0.0.40
codegen_flags: <defaults>
</compile_context>

<pallas_src>
import functools

import jax
import jax.numpy as jnp
from jax.experimental import pallas as pl
from jax.experimental.pallas import tpu as pltpu


def _mlp_kernel(seed_ref, x_ref, w1_ref, b1_ref, w2_ref, b2_ref, w3_ref,
                b3_ref, o_ref, *, dropout_p, training, block_m):
    """Fused MLP forward for one batch tile. Weights are VMEM-resident."""
    compute_dtype = w1_ref.dtype
    x = x_ref[...].astype(compute_dtype)

    if training and dropout_p > 0.0:
        seed_u = seed_ref[0].astype(jnp.uint32)
        row0_u = (pl.program_id(0) * block_m).astype(jnp.uint32)

    def dropout(h, layer_tag):
        # Inverted dropout (matches torch.nn.Dropout training semantics).
        if (not training) or dropout_p <= 0.0:
            return h  # eval mode: identity
        keep = 1.0 - float(dropout_p)
        # keep-threshold on full uint32 range, clamped to avoid wrap at keep~1.
        thresh = min(int(round(keep * 4294967296.0)), 4294967295)
        rows = jax.lax.broadcasted_iota(jnp.int32, h.shape, 0).astype(jnp.uint32)
        cols = jax.lax.broadcasted_iota(jnp.int32, h.shape, 1).astype(jnp.uint32)
        rows = rows + row0_u  # global row index -> per-tile-independent masks
        z = (rows * jnp.uint32(2654435761)
             ^ cols * jnp.uint32(2246822519)
             ^ seed_u * jnp.uint32(3266489917)
             ^ jnp.uint32(layer_tag))
        # lowbias32-style finalizer for good bit mixing.
        z = z ^ (z >> 16)
        z = z * jnp.uint32(2146121517)
        z = z ^ (z >> 15)
        z = z * jnp.uint32(2221647499)
        z = z ^ (z >> 16)
        keep_mask = z < jnp.uint32(thresh)
        return jnp.where(keep_mask, h * (1.0 / keep), 0.0)

    # fc1 + relu + dropout (MXU accumulates in f32; elementwise stays f32)
    h1 = jnp.dot(x, w1_ref[...], preferred_element_type=jnp.float32)
    h1 = jnp.maximum(h1 + b1_ref[...], 0.0)
    h1 = dropout(h1, 0x1B873593)

    # fc2 + relu + dropout
    h2 = jnp.dot(h1.astype(compute_dtype), w2_ref[...],
                 preferred_element_type=jnp.float32)
    h2 = jnp.maximum(h2 + b2_ref[...], 0.0)
    h2 = dropout(h2, 0x52DCE729)

    # output layer (no activation)
    out = jnp.dot(h2.astype(compute_dtype), w3_ref[...],
                  preferred_element_type=jnp.float32)
    o_ref[...] = (out + b3_ref[...]).astype(o_ref.dtype)


def _round_up(n, m):
    return ((n + m - 1) // m) * m


def _pad2(a, rows, cols):
    return jnp.pad(a, ((0, rows - a.shape[0]), (0, cols - a.shape[1])))


def mlp_forward(x, params, *, dropout_p=0.5, training=False, seed=0,
                compute_dtype=jnp.float32, block_m=256):
    """Run the fused MLP Pallas kernel.

    x: (B, input_dim) float32
    params: dict with w1 (in,h1), b1 (h1,), w2 (h1,h2), b2 (h2,),
            w3 (h2,out), b3 (out,)   (weights stored as (in, out))
    compute_dtype: dtype fed to the MXU (e.g. jnp.bfloat16 on v6e/v7x);
                   accumulation / bias / relu / dropout remain float32.
    """
    w1, b1 = params["w1"], params["b1"]
    w2, b2 = params["w2"], params["b2"]
    w3, b3 = params["w3"], params["b3"]

    B, d_in = x.shape
    h1d, h2d, d_out = w1.shape[1], w2.shape[1], w3.shape[1]

    # Lane-dense padding: every feature dim -> multiple of 128.
    d_in_p = _round_up(d_in, 128)
    h1_p = _round_up(h1d, 128)
    h2_p = _round_up(h2d, 128)
    d_out_p = _round_up(d_out, 128)

    # Batch tile: multiple of 8 sublanes, capped at block_m.
    tm = min(_round_up(block_m, 8), _round_up(B, 8))
    pb = _round_up(B, tm)
    grid = (pb // tm,)

    x_p = _pad2(x.astype(jnp.float32), pb, d_in_p)
    w1_p = _pad2(w1, d_in_p, h1_p).astype(compute_dtype)
    w2_p = _pad2(w2, h1_p, h2_p).astype(compute_dtype)
    w3_p = _pad2(w3, h2_p, d_out_p).astype(compute_dtype)
    b1_p = _pad2(b1.reshape(1, -1).astype(jnp.float32), 1, h1_p)
    b2_p = _pad2(b2.reshape(1, -1).astype(jnp.float32), 1, h2_p)
    b3_p = _pad2(b3.reshape(1, -1).astype(jnp.float32), 1, d_out_p)
    seed_arr = jnp.asarray([seed], dtype=jnp.int32)

    kernel = functools.partial(_mlp_kernel, dropout_p=float(dropout_p),
                               training=bool(training), block_m=tm)

    # Rough VMEM budget: resident weights (x2 for buffering), biases,
    # double-buffered x/out tiles, intermediate activations. Clamp to 64 MiB
    # (v7x physical VMEM per TensorCore); floor at the 32 MiB scoped default.
    wbytes = jnp.dtype(compute_dtype).itemsize
    est = (2 * (d_in_p * h1_p + h1_p * h2_p + h2_p * d_out_p) * wbytes
           + 2 * (h1_p + h2_p + d_out_p) * 4
           + 2 * tm * (d_in_p + d_out_p) * 4 * 2
           + 4 * tm * (h1_p + h2_p) * 4)
    vmem_limit = int(min(max(2 * est, 32 << 20), 64 << 20))

    out_p = pl.pallas_call(
        kernel,
        out_shape=jax.ShapeDtypeStruct((pb, d_out_p), jnp.float32),
        grid=grid,
        in_specs=[
            pl.BlockSpec(memory_space=pltpu.MemorySpace.SMEM),    # seed scalar
            pl.BlockSpec((tm, d_in_p), lambda i: (i, 0)),         # x tile
            pl.BlockSpec((d_in_p, h1_p), lambda i: (0, 0)),       # w1 (resident)
            pl.BlockSpec((1, h1_p), lambda i: (0, 0)),            # b1
            pl.BlockSpec((h1_p, h2_p), lambda i: (0, 0)),         # w2 (resident)
            pl.BlockSpec((1, h2_p), lambda i: (0, 0)),            # b2
            pl.BlockSpec((h2_p, d_out_p), lambda i: (0, 0)),      # w3 (resident)
            pl.BlockSpec((1, d_out_p), lambda i: (0, 0)),         # b3
        ],
        out_specs=pl.BlockSpec((tm, d_out_p), lambda i: (i, 0)),
        compiler_params=pltpu.CompilerParams(
            dimension_semantics=("parallel",),   # megacore sharding on v7x
            vmem_limit_bytes=vmem_limit),
    )(seed_arr, x_p, w1_p, b1_p, w2_p, b2_p, w3_p, b3_p)

    return out_p[:B, :d_out]


def init_params(key, input_dim, hid_dim1, hid_dim2, output_dim):
    """Deterministic init mimicking nn.Linear's uniform(-1/sqrt(fan_in), ...)."""
    def linear(k, fan_in, fan_out):
        kw, kb = jax.random.split(k)
        bound = 1.0 / jnp.sqrt(fan_in)
        w = jax.random.uniform(kw, (fan_in, fan_out), jnp.float32, -bound, bound)
        b = jax.random.uniform(kb, (fan_out,), jnp.float32, -bound, bound)
        return w, b

    k1, k2, k3 = jax.random.split(key, 3)
    w1, b1 = linear(k1, input_dim, hid_dim1)
    w2, b2 = linear(k2, hid_dim1, hid_dim2)
    w3, b3 = linear(k3, hid_dim2, output_dim)
    return {"w1": w1, "b1": b1, "w2": w2, "b2": b2, "w3": w3, "b3": b3}


def mlp_reference(x, p):
    """Pure-JAX reference (eval mode: dropout = identity)."""
    h1 = jnp.maximum(x @ p["w1"] + p["b1"], 0.0)
    h2 = jnp.maximum(h1 @ p["w2"] + p["b2"], 0.0)
    return h2 @ p["w3"] + p["b3"]


if __name__ == "__main__":
    # Small shapes consistent with the module's constructor.
    batch, input_dim, hid_dim1, hid_dim2, output_dim = 8, 16, 32, 32, 8
    dropout = 0.5

    key = jax.random.PRNGKey(0)
    kx, kp = jax.random.split(key)
    x = jax.random.normal(kx, (batch, input_dim), dtype=jnp.float32)
    params = init_params(kp, input_dim, hid_dim1, hid_dim2, output_dim)

    # Eval-mode forward, f32 compute — compare vs pure-JAX reference.
    out = mlp_forward(x, params, dropout_p=dropout, training=False)
    out = jax.block_until_ready(out)
    ref = mlp_reference(x, params)
    assert out.shape == (batch, output_dim)
    assert jnp.allclose(out, ref, atol=1e-4, rtol=1e-4), "f32 mismatch vs reference"

    # Eval-mode forward, bf16 weights on the MXU (v6e/v7x fast path) — loose tol.
    out_bf16 = mlp_forward(x, params, dropout_p=dropout, training=False,
                           compute_dtype=jnp.bfloat16)
    out_bf16 = jax.block_until_ready(out_bf16)
    assert jnp.allclose(out_bf16, ref, atol=5e-2, rtol=5e-2), "bf16 mismatch vs reference"

    # Training-mode forward (in-kernel hash-PRNG dropout) — run and sanity check.
    out_tr = mlp_forward(x, params, dropout_p=dropout, training=True, seed=123)
    out_tr = jax.block_until_ready(out_tr)
    assert out_tr.shape == (batch, output_dim)
    assert bool(jnp.all(jnp.isfinite(out_tr)))

    print("KERNEL_OK")
</pallas_src>

<mosaic_0001>
module attributes {stable_mosaic.version = 11 : i64} {
  func.func @_mlp_kernel(%arg0: i32, %arg1: memref<1xi32, #tpu.memory_space<smem>>, %arg2: memref<8x128xf32, #tpu.memory_space<vmem>>, %arg3: memref<128x128xf32, #tpu.memory_space<vmem>>, %arg4: memref<1x128xf32, #tpu.memory_space<vmem>>, %arg5: memref<128x128xf32, #tpu.memory_space<vmem>>, %arg6: memref<1x128xf32, #tpu.memory_space<vmem>>, %arg7: memref<128x128xf32, #tpu.memory_space<vmem>>, %arg8: memref<1x128xf32, #tpu.memory_space<vmem>>, %arg9: memref<8x128xf32, #tpu.memory_space<vmem>>) attributes {dimension_semantics = [#tpu.dimension_semantics<parallel>], iteration_bounds = array<i64: 1>, scalar_prefetch = 0 : i64, scratch_operands = 0 : i64, tpu.core_type = #tpu.core_type<tc>, window_params = [{transform_indices = @transform_0, window_bounds = array<i64: 1>}, {transform_indices = @transform_1, window_bounds = array<i64: 8, 128>}, {pipeline_mode = #tpu.pipeline_mode<synchronous>, transform_indices = @transform_2, window_bounds = array<i64: 128, 128>}, {pipeline_mode = #tpu.pipeline_mode<synchronous>, transform_indices = @transform_3, window_bounds = array<i64: 1, 128>}, {pipeline_mode = #tpu.pipeline_mode<synchronous>, transform_indices = @transform_4, window_bounds = array<i64: 128, 128>}, {pipeline_mode = #tpu.pipeline_mode<synchronous>, transform_indices = @transform_5, window_bounds = array<i64: 1, 128>}, {pipeline_mode = #tpu.pipeline_mode<synchronous>, transform_indices = @transform_6, window_bounds = array<i64: 128, 128>}, {pipeline_mode = #tpu.pipeline_mode<synchronous>, transform_indices = @transform_7, window_bounds = array<i64: 1, 128>}, {transform_indices = @transform_8, window_bounds = array<i64: 8, 128>}]} {
    %c0 = arith.constant 0 : index
    %c0_0 = arith.constant 0 : index
    %0 = vector.load %arg2[%c0, %c0_0] : memref<8x128xf32, #tpu.memory_space<vmem>>, vector<8x128xf32>
    %c0_1 = arith.constant 0 : index
    %c0_2 = arith.constant 0 : index
    %1 = vector.load %arg3[%c0_1, %c0_2] : memref<128x128xf32, #tpu.memory_space<vmem>>, vector<128x128xf32>
    %cst = arith.constant dense<0.000000e+00> : vector<8x128xf32>
    %2 = tpu.matmul %0, %1, %cst {dimension_numbers = #tpu.dot_dimension_numbers<[1], [0], [0], [1], [0, 0, 1, 1], [], []>} : vector<8x128xf32>, vector<128x128xf32>, vector<8x128xf32> -> vector<8x128xf32>
    %c0_3 = arith.constant 0 : index
    %c0_4 = arith.constant 0 : index
    %3 = vector.load %arg4[%c0_3, %c0_4] : memref<1x128xf32, #tpu.memory_space<vmem>>, vector<1x128xf32>
    %4 = vector.broadcast %3 : vector<1x128xf32> to vector<8x128xf32>
    %5 = arith.addf %2, %4 : vector<8x128xf32>
    %cst_5 = arith.constant 0.000000e+00 : f32
    %6 = vector.broadcast %cst_5 : f32 to vector<8x128xf32>
    %7 = arith.maximumf %5, %6 : vector<8x128xf32>
    %c0_6 = arith.constant 0 : index
    %c0_7 = arith.constant 0 : index
    %8 = vector.load %arg5[%c0_6, %c0_7] : memref<128x128xf32, #tpu.memory_space<vmem>>, vector<128x128xf32>
    %cst_8 = arith.constant dense<0.000000e+00> : vector<8x128xf32>
    %9 = tpu.matmul %7, %8, %cst_8 {dimension_numbers = #tpu.dot_dimension_numbers<[1], [0], [0], [1], [0, 0, 1, 1], [], []>} : vector<8x128xf32>, vector<128x128xf32>, vector<8x128xf32> -> vector<8x128xf32>
    %c0_9 = arith.constant 0 : index
    %c0_10 = arith.constant 0 : index
    %10 = vector.load %arg6[%c0_9, %c0_10] : memref<1x128xf32, #tpu.memory_space<vmem>>, vector<1x128xf32>
    %11 = vector.broadcast %10 : vector<1x128xf32> to vector<8x128xf32>
    %12 = arith.addf %9, %11 : vector<8x128xf32>
    %cst_11 = arith.constant 0.000000e+00 : f32
    %13 = vector.broadcast %cst_11 : f32 to vector<8x128xf32>
    %14 = arith.maximumf %12, %13 : vector<8x128xf32>
    %c0_12 = arith.constant 0 : index
    %c0_13 = arith.constant 0 : index
    %15 = vector.load %arg7[%c0_12, %c0_13] : memref<128x128xf32, #tpu.memory_space<vmem>>, vector<128x128xf32>
    %cst_14 = arith.constant dense<0.000000e+00> : vector<8x128xf32>
    %16 = tpu.matmul %14, %15, %cst_14 {dimension_numbers = #tpu.dot_dimension_numbers<[1], [0], [0], [1], [0, 0, 1, 1], [], []>} : vector<8x128xf32>, vector<128x128xf32>, vector<8x128xf32> -> vector<8x128xf32>
    %c0_15 = arith.constant 0 : index
    %c0_16 = arith.constant 0 : index
    %17 = vector.load %arg8[%c0_15, %c0_16] : memref<1x128xf32, #tpu.memory_space<vmem>>, vector<1x128xf32>
    %18 = vector.broadcast %17 : vector<1x128xf32> to vector<8x128xf32>
    %19 = arith.addf %16, %18 : vector<8x128xf32>
    %c0_17 = arith.constant 0 : index
    %c0_18 = arith.constant 0 : index
    %20 = vector.load %arg9[%c0_17, %c0_18] : memref<8x128xf32, #tpu.memory_space<vmem>>, vector<8x128xf32>
    tpu.vector_store %arg9[%c0_17, %c0_18], %19 {strides = array<i32>} : memref<8x128xf32, #tpu.memory_space<vmem>>, vector<8x128xf32>,
    return
  }
  func.func @transform_0(%arg0: i32) -> i32 {
    %c0_i32 = arith.constant 0 : i32
    %c0_i32_0 = arith.constant 0 : i32
    return %c0_i32 : i32
  }
  func.func @transform_1(%arg0: i32) -> (i32, i32) {
    %c0_i32 = arith.constant 0 : i32
    %c0_i32_0 = arith.constant 0 : i32
    return %arg0, %c0_i32 : i32, i32
  }
  func.func @transform_2(%arg0: i32) -> (i32, i32) {
    %c0_i32 = arith.constant 0 : i32
    %c0_i32_0 = arith.constant 0 : i32
    %c0_i32_1 = arith.constant 0 : i32
    return %c0_i32, %c0_i32_0 : i32, i32
  }
  func.func @transform_3(%arg0: i32) -> (i32, i32) {
    %c0_i32 = arith.constant 0 : i32
    %c0_i32_0 = arith.constant 0 : i32
    %c0_i32_1 = arith.constant 0 : i32
    return %c0_i32, %c0_i32_0 : i32, i32
  }
  func.func @transform_4(%arg0: i32) -> (i32, i32) {
    %c0_i32 = arith.constant 0 : i32
    %c0_i32_0 = arith.constant 0 : i32
    %c0_i32_1 = arith.constant 0 : i32
    return %c0_i32, %c0_i32_0 : i32, i32
  }
  func.func @transform_5(%arg0: i32) -> (i32, i32) {
    %c0_i32 = arith.constant 0 : i32
    %c0_i32_0 = arith.constant 0 : i32
    %c0_i32_1 = arith.constant 0 : i32
    return %c0_i32, %c0_i32_0 : i32, i32
  }
  func.func @transform_6(%arg0: i32) -> (i32, i32) {
    %c0_i32 = arith.constant 0 : i32
    %c0_i32_0 = arith.constant 0 : i32
    %c0_i32_1 = arith.constant 0 : i32
    return %c0_i32, %c0_i32_0 : i32, i32
  }
  func.func @transform_7(%arg0: i32) -> (i32, i32) {
    %c0_i32 = arith.constant 0 : i32
    %c0_i32_0 = arith.constant 0 : i32
    %c0_i32_1 = arith.constant 0 : i32
    return %c0_i32, %c0_i32_0 : i32, i32
  }
  func.func @transform_8(%arg0: i32) -> (i32, i32) {
    %c0_i32 = arith.constant 0 : i32
    %c0_i32_0 = arith.constant 0 : i32
    return %arg0, %c0_i32 : i32, i32
  }
}

</mosaic_0001>

<llo_original>
// kernel: tpu_custom_call.1
$region0: #{tpu_custom_call.1}
  #allocation0 [shape = 'u32[]', space=smem, size = 0x4, offset = 0x4, fixed_abs, tag = 'smem constant byte address 0x4 - core index']
  #allocation1 [shape = 'u32[144,128]{1,0:T(1,128)}', space=vmem, size = 0x12000, scoped, tag = 'internal scratch']
  #allocation2 [shape = 's32[1]{0:T(128)S(6)}', space=smem, size = 0x200, scoped, tag = 'scoped memory for tpu_custom_call.1']
  %s0 = inlined_call_operand.<no memory space> [shape: s32[1], index: 0, kind: input, shape index: {}]
  %s1 = inlined_call_operand.hbm [shape: f32[8,128], index: 1, kind: input, shape index: {}]
  %s2 = inlined_call_operand.hbm [shape: f32[128,128], index: 2, kind: input, shape index: {}]
  %s3 = inlined_call_operand.vmem [shape: f32[1,128], index: 3, kind: input, shape index: {}]
  %s4 = inlined_call_operand.hbm [shape: f32[128,128], index: 4, kind: input, shape index: {}]
  %s5 = inlined_call_operand.vmem [shape: f32[1,128], index: 5, kind: input, shape index: {}]
  %s6 = inlined_call_operand.hbm [shape: f32[128,128], index: 6, kind: input, shape index: {}]
  %s7 = inlined_call_operand.vmem [shape: f32[1,128], index: 7, kind: input, shape index: {}]
  %s8 = inlined_call_operand.hbm [shape: f32[8,128], index: 8, kind: output, shape index: {}]
  %s9 = sld [smem:[#allocation0]]
  $region58: #{tpu_custom_call.1} parent=0
    _
  %s11 = ssub.s32 1, %s9
  %s12 = scalar_select 0, %s11, %s9
  %13 = sst [smem:[#allocation2]] %s0
  $region1: #{tpu_custom_call.1} parent=0
    #allocation3 [shape = 'u8[4096]{0}', space=vmem, size = 0x1000, scoped, tag = 'input window, operand 1, single buffered']
    #allocation4 [shape = 's32[1]{0}', space=sflag, size = 0x4, scoped, tag = 'scoped memory for tpu_custom_call.1']
    #allocation5 [shape = 's32[1]{0}', space=sflag, size = 0x4, scoped, tag = 'scoped memory for tpu_custom_call.1']
    #allocation6 [shape = 'u8[65536]{0}', space=vmem, size = 0x10000, scoped, tag = 'input window, operand 2, single buffered']
    #allocation7 [shape = 's32[1]{0}', space=sflag, size = 0x4, scoped, tag = 'scoped memory for tpu_custom_call.1']
    #allocation8 [shape = 'u8[65536]{0}', space=vmem, size = 0x10000, scoped, tag = 'input window, operand 4, single buffered']
    #allocation9 [shape = 'u8[65536]{0}', space=vmem, size = 0x10000, scoped, tag = 'input window, operand 6, single buffered']
    #allocation10 [shape = 's32[1]{0}', space=sflag, size = 0x4, scoped, tag = 'scoped memory for tpu_custom_call.1']
    #allocation11 [shape = 'u8[4096]{0}', space=vmem, size = 0x1000, scoped, tag = 'output window, operand 0, single buffered']
    %14 = vsyncpa [#allocation4], 0
    %15 = vsyncpa [#allocation7], 0
    %16 = vsyncpa [#allocation10], 0
    %17 = vsyncpa [#allocation5], 0
    // Predicated region
    $region2: #{tpu_custom_call.1} parent=1 // pred_check
      _
    $region3: #{tpu_custom_call.1} parent=1 // pred_check_branch
      %19 = sbr.rel (0) target = $region5
    $region4: #{tpu_custom_call.1} parent=1 // pred_region
      _
    $region5: #{tpu_custom_call.1} parent=1 // pred_fallthru
      _
    // Predicated region
    $region6: #{tpu_custom_call.1} parent=1 // pred_check
      _
    $region7: #{tpu_custom_call.1} parent=1 // pred_check_branch
      %21 = sbr.rel (0) target = $region9
    $region8: #{tpu_custom_call.1} parent=1 // pred_region
      %s23 = ssub.s32 128, 128
      %24 = vsyncadd [#allocation4], %s23
      %s26 = sshll.u32 [#allocation3], 4
      %s27 = int_to_ptr.vmem [resolvable:$true] %s26
      %29 = dma.hbm_to_vmem [thread:$0]  %s1, 128, %s27, [#allocation4]
    $region9: #{tpu_custom_call.1} parent=1 // pred_fallthru
      _
    // Predicated region
    $region10: #{tpu_custom_call.1} parent=1 // pred_check
      _
    $region11: #{tpu_custom_call.1} parent=1 // pred_check_branch
      %31 = sbr.rel (0) target = $region13
    $region12: #{tpu_custom_call.1} parent=1 // pred_region
      %s33 = ssub.s32 2048, 2048
      %34 = vsyncadd [#allocation7], %s33
      %s35 = sshll.u32 [#allocation6], 4
      %s36 = int_to_ptr.vmem [resolvable:$true] %s35
      %41 = dma.hbm_to_vmem [thread:$0]  %s2, 2048, %s36, [#allocation7], 128, 128, 8
    $region13: #{tpu_custom_call.1} parent=1 // pred_fallthru
      _
    // Predicated region
    $region14: #{tpu_custom_call.1} parent=1 // pred_check
      _
    $region15: #{tpu_custom_call.1} parent=1 // pred_check_branch
      %43 = sbr.rel (0) target = $region17
    $region16: #{tpu_custom_call.1} parent=1 // pred_region
      _
    $region17: #{tpu_custom_call.1} parent=1 // pred_fallthru
      _
    // Predicated region
    $region18: #{tpu_custom_call.1} parent=1 // pred_check
      _
    $region19: #{tpu_custom_call.1} parent=1 // pred_check_branch
      %45 = sbr.rel (0) target = $region21
    $region20: #{tpu_custom_call.1} parent=1 // pred_region
      %s47 = ssub.s32 2048, 2048
      %48 = vsyncadd [#allocation7], %s47
      %s49 = sshll.u32 [#allocation8], 4
      %s50 = int_to_ptr.vmem [resolvable:$true] %s49
      %55 = dma.hbm_to_vmem [thread:$0]  %s4, 2048, %s50, [#allocation7], 128, 128, 8
    $region21: #{tpu_custom_call.1} parent=1 // pred_fallthru
      _
    // Predicated region
    $region22: #{tpu_custom_call.1} parent=1 // pred_check
      _
    $region23: #{tpu_custom_call.1} parent=1 // pred_check_branch
      %57 = sbr.rel (0) target = $region25
    $region24: #{tpu_custom_call.1} parent=1 // pred_region
      _
    $region25: #{tpu_custom_call.1} parent=1 // pred_fallthru
      _
    // Predicated region
    $region26: #{tpu_custom_call.1} parent=1 // pred_check
      _
    $region27: #{tpu_custom_call.1} parent=1 // pred_check_branch
      %59 = sbr.rel (0) target = $region29
    $region28: #{tpu_custom_call.1} parent=1 // pred_region
      %s61 = ssub.s32 2048, 2048
      %62 = vsyncadd [#allocation10], %s61
      %s63 = sshll.u32 [#allocation9], 4
      %s64 = int_to_ptr.vmem [resolvable:$true] %s63
      %69 = dma.hbm_to_vmem [thread:$0]  %s6, 2048, %s64, [#allocation10], 128, 128, 8
    $region29: #{tpu_custom_call.1} parent=1 // pred_fallthru
      _
    // Predicated region
    $region30: #{tpu_custom_call.1} parent=1 // pred_check
      _
    $region31: #{tpu_custom_call.1} parent=1 // pred_check_branch
      %71 = sbr.rel (0) target = $region33
    $region32: #{tpu_custom_call.1} parent=1 // pred_region
      _
    $region33: #{tpu_custom_call.1} parent=1 // pred_fallthru
      _
    // Predicated region
    $region34: #{tpu_custom_call.1} parent=1 // pred_check
      _
    $region35: #{tpu_custom_call.1} parent=1 // pred_check_branch
      %73 = sbr.rel (0) target = $region37
    $region36: #{tpu_custom_call.1} parent=1 // pred_region
      %74 = dma.done [#allocation4], 128
    $region37: #{tpu_custom_call.1} parent=1 // pred_fallthru
      _
    // Predicated region
    $region38: #{tpu_custom_call.1} parent=1 // pred_check
      _
    $region39: #{tpu_custom_call.1} parent=1 // pred_check_branch
      %76 = sbr.rel (0) target = $region41
    $region40: #{tpu_custom_call.1} parent=1 // pred_region
      %77 = dma.done [#allocation7], 2048
    $region41: #{tpu_custom_call.1} parent=1 // pred_fallthru
      _
    // Predicated region
    $region42: #{tpu_custom_call.1} parent=1 // pred_check
      _
    $region43: #{tpu_custom_call.1} parent=1 // pred_check_branch
      %79 = sbr.rel (0) target = $region45
    $region44: #{tpu_custom_call.1} parent=1 // pred_region
      %80 = dma.done [#allocation7], 2048
    $region45: #{tpu_custom_call.1} parent=1 // pred_fallthru
      _
    // Predicated region
    $region46: #{tpu_custom_call.1} parent=1 // pred_check
      _
    $region47: #{tpu_custom_call.1} parent=1 // pred_check_branch
      %82 = sbr.rel (0) target = $region49
    $region48: #{tpu_custom_call.1} parent=1 // pred_region
      %83 = dma.done [#allocation10], 2048
    $region49: #{tpu_custom_call.1} parent=1 // pred_fallthru
      _
    %v84 = vld [vmem:[#allocation3] sm:$0xff]
    %v85 = vld [vmem:[#allocation6] sm:$0xff]
    %v86 = vld [vmem:[#allocation6 + $0x8] sm:$0xff]
    %v87 = vld [vmem:[#allocation6 + $0x10] sm:$0xff]
    %v88 = vld [vmem:[#allocation6 + $0x18] sm:$0xff]
    %v89 = vld [vmem:[#allocation6 + $0x20] sm:$0xff]
    %v90 = vld [vmem:[#allocation6 + $0x28] sm:$0xff]
    %v91 = vld [vmem:[#allocation6 + $0x30] sm:$0xff]
    %v92 = vld [vmem:[#allocation6 + $0x38] sm:$0xff]
    %v93 = vld [vmem:[#allocation6 + $0x40] sm:$0xff]
    %v94 = vld [vmem:[#allocation6 + $0x48] sm:$0xff]
    %v95 = vld [vmem:[#allocation6 + $0x50] sm:$0xff]
    %v96 = vld [vmem:[#allocation6 + $0x58] sm:$0xff]
    %v97 = vld [vmem:[#allocation6 + $0x60] sm:$0xff]
    %v98 = vld [vmem:[#allocation6 + $0x68] sm:$0xff]
    %v99 = vld [vmem:[#allocation6 + $0x70] sm:$0xff]
    %v100 = vld [vmem:[#allocation6 + $0x78] sm:$0xff]
    %v101 = vld [vmem:[%s3] sm:$0x1]
    %v103 = vlaneseq
    %v104 = vshrl.u32 %v103, 7
    %v105 = vsub.s32 0, %v104
    %v106 = vrot.slane %v101, %v105
    %108 = vmatprep.subr.mxu0 0.0
    %109 = vmatpush1.msra.mxu0 %v85
    %110 = vmatprep.subr.mxu0 0.0
    %111 = vmatpush1.msra.mxu0 %v86
    %112 = vmatprep.subr.mxu0 0.0
    %113 = vmatpush1.msra.mxu0 %v87
    %114 = vmatprep.subr.mxu0 0.0
    %115 = vmatpush1.msra.mxu0 %v88
    %116 = vmatprep.subr.mxu0 0.0
    %117 = vmatpush1.msra.mxu0 %v89
    %118 = vmatprep.subr.mxu0 0.0
    %119 = vmatpush1.msra.mxu0 %v90
    %120 = vmatprep.subr.mxu0 0.0
    %121 = vmatpush1.msra.mxu0 %v91
    %122 = vmatprep.subr.mxu0 0.0
    %123 = vmatpush1.msra.mxu0 %v92
    %124 = vmatprep.subr.mxu0 0.0
    %125 = vmatpush1.msra.mxu0 %v93
    %126 = vmatprep.subr.mxu0 0.0
    %127 = vmatpush1.msra.mxu0 %v94
    %128 = vmatprep.subr.mxu0 0.0
    %129 = vmatpush1.msra.mxu0 %v95
    %130 = vmatprep.subr.mxu0 0.0
    %131 = vmatpush1.msra.mxu0 %v96
    %132 = vmatprep.subr.mxu0 0.0
    %133 = vmatpush1.msra.mxu0 %v97
    %134 = vmatprep.subr.mxu0 0.0
    %135 = vmatpush1.msra.mxu0 %v98
    %136 = vmatprep.subr.mxu0 0.0
    %137 = vmatpush1.msra.mxu0 %v99
    %138 = vmatprep.subr.mxu0 0.0
    %139 = vmatpush1.msra.mxu0 %v100
    %140 = vmatprep.subr.mxu0 0.0
    %141 = vmatpush1.msra.mxu0 0.0
    %142 = vmatprep.subr.mxu0 0.0
    %143 = vmatpush1.msra.mxu0 0.0
    %144 = vmatprep.subr.mxu0 0.0
    %145 = vmatpush1.msra.mxu0 0.0
    %146 = vmatprep.subr.mxu0 0.0
    %147 = vmatpush1.msra.mxu0 0.0
    %148 = vmatprep.subr.mxu0 0.0
    %149 = vmatpush1.msra.mxu0 0.0
    %150 = vmatprep.subr.mxu0 0.0
    %151 = vmatpush1.msra.mxu0 0.0
    %152 = vmatprep.subr.mxu0 0.0
    %153 = vmatpush1.msra.mxu0 0.0
    %154 = vmatprep.subr.mxu0 0.0
    %155 = vmatpush1.msra.mxu0 0.0
    %156 = vmatprep.subr.mxu0 0.0
    %157 = vmatpush1.msra.mxu0 0.0
    %158 = vmatprep.subr.mxu0 0.0
    %159 = vmatpush1.msra.mxu0 0.0
    %160 = vmatprep.subr.mxu0 0.0
    %161 = vmatpush1.msra.mxu0 0.0
    %162 = vmatprep.subr.mxu0 0.0
    %163 = vmatpush1.msra.mxu0 0.0
    %164 = vmatprep.subr.mxu0 0.0
    %165 = vmatpush1.msra.mxu0 0.0
    %166 = vmatprep.subr.mxu0 0.0
    %167 = vmatpush1.msra.mxu0 0.0
    %168 = vmatprep.subr.mxu0 0.0
    %169 = vmatpush1.msra.mxu0 0.0
    %170 = vmatprep.subr.mxu0 0.0
    %171 = vmatpush1.msra.mxu0 0.0
    %172 = vmatprep.mubr.f32.mxu0 0.0
    %173 = vmatmul.mubr.f32.gmra.mrb[0].mxu0 %v84
    %v174 = vpop.f32.mrb[0].mxu0
    %v175 = vadd.f32 %v106, %v174
    %v176 = vpop.f32.mrb[0].mxu0
    %177 = vdwg.mxu0
    %v178 = vmax.f32 %v175, 0.0
    %v179 = vld [vmem:[#allocation8] sm:$0xff]
    %v180 = vld [vmem:[#allocation8 + $0x8] sm:$0xff]
    %v181 = vld [vmem:[#allocation8 + $0x10] sm:$0xff]
    %v182 = vld [vmem:[#allocation8 + $0x18] sm:$0xff]
    %v183 = vld [vmem:[#allocation8 + $0x20] sm:$0xff]
    %v184 = vld [vmem:[#allocation8 + $0x28] sm:$0xff]
    %v185 = vld [vmem:[#allocation8 + $0x30] sm:$0xff]
    %v186 = vld [vmem:[#allocation8 + $0x38] sm:$0xff]
    %v187 = vld [vmem:[#allocation8 + $0x40] sm:$0xff]
    %v188 = vld [vmem:[#allocation8 + $0x48] sm:$0xff]
    %v189 = vld [vmem:[#allocation8 + $0x50] sm:$0xff]
    %v190 = vld [vmem:[#allocation8 + $0x58] sm:$0xff]
    %v191 = vld [vmem:[#allocation8 + $0x60] sm:$0xff]
    %v192 = vld [vmem:[#allocation8 + $0x68] sm:$0xff]
    %v193 = vld [vmem:[#allocation8 + $0x70] sm:$0xff]
    %v194 = vld [vmem:[#allocation8 + $0x78] sm:$0xff]
    %v195 = vld [vmem:[%s5] sm:$0x1]
    %v197 = vlaneseq
    %v198 = vshrl.u32 %v197, 7
    %v199 = vsub.s32 0, %v198
    %v200 = vrot.slane %v195, %v199
    %202 = vmatprep.subr.mxu0 0.0
    %203 = vmatpush1.msra.mxu0 %v179
    %204 = vmatprep.subr.mxu0 0.0
    %205 = vmatpush1.msra.mxu0 %v180
    %206 = vmatprep.subr.mxu0 0.0
    %207 = vmatpush1.msra.mxu0 %v181
    %208 = vmatprep.subr.mxu0 0.0
    %209 = vmatpush1.msra.mxu0 %v182
    %210 = vmatprep.subr.mxu0 0.0
    %211 = vmatpush1.msra.mxu0 %v183
    %212 = vmatprep.subr.mxu0 0.0
    %213 = vmatpush1.msra.mxu0 %v184
    %214 = vmatprep.subr.mxu0 0.0
    %215 = vmatpush1.msra.mxu0 %v185
    %216 = vmatprep.subr.mxu0 0.0
    %217 = vmatpush1.msra.mxu0 %v186
    %218 = vmatprep.subr.mxu0 0.0
    %219 = vmatpush1.msra.mxu0 %v187
    %220 = vmatprep.subr.mxu0 0.0
    %221 = vmatpush1.msra.mxu0 %v188
    %222 = vmatprep.subr.mxu0 0.0
    %223 = vmatpush1.msra.mxu0 %v189
    %224 = vmatprep.subr.mxu0 0.0
    %225 = vmatpush1.msra.mxu0 %v190
    %226 = vmatprep.subr.mxu0 0.0
    %227 = vmatpush1.msra.mxu0 %v191
    %228 = vmatprep.subr.mxu0 0.0
    %229 = vmatpush1.msra.mxu0 %v192
    %230 = vmatprep.subr.mxu0 0.0
    %231 = vmatpush1.msra.mxu0 %v193
    %232 = vmatprep.subr.mxu0 0.0
    %233 = vmatpush1.msra.mxu0 %v194
    %234 = vmatprep.subr.mxu0 0.0
    %235 = vmatpush1.msra.mxu0 0.0
    %236 = vmatprep.subr.mxu0 0.0
    %237 = vmatpush1.msra.mxu0 0.0
    %238 = vmatprep.subr.mxu0 0.0
    %239 = vmatpush1.msra.mxu0 0.0
    %240 = vmatprep.subr.mxu0 0.0
    %241 = vmatpush1.msra.mxu0 0.0
    %242 = vmatprep.subr.mxu0 0.0
    %243 = vmatpush1.msra.mxu0 0.0
    %244 = vmatprep.subr.mxu0 0.0
    %245 = vmatpush1.msra.mxu0 0.0
    %246 = vmatprep.subr.mxu0 0.0
    %247 = vmatpush1.msra.mxu0 0.0
    %248 = vmatprep.subr.mxu0 0.0
    %249 = vmatpush1.msra.mxu0 0.0
    %250 = vmatprep.subr.mxu0 0.0
    %251 = vmatpush1.msra.mxu0 0.0
    %252 = vmatprep.subr.mxu0 0.0
    %253 = vmatpush1.msra.mxu0 0.0
    %254 = vmatprep.subr.mxu0 0.0
    %255 = vmatpush1.msra.mxu0 0.0
    %256 = vmatprep.subr.mxu0 0.0
    %257 = vmatpush1.msra.mxu0 0.0
    %258 = vmatprep.subr.mxu0 0.0
    %259 = vmatpush1.msra.mxu0 0.0
    %260 = vmatprep.subr.mxu0 0.0
    %261 = vmatpush1.msra.mxu0 0.0
    %262 = vmatprep.subr.mxu0 0.0
    %263 = vmatpush1.msra.mxu0 0.0
    %264 = vmatprep.subr.mxu0 0.0
    %265 = vmatpush1.msra.mxu0 0.0
    %266 = vmatprep.mubr.f32.mxu0 0.0
    %267 = vmatmul.mubr.f32.gmra.mrb[0].mxu0 %v178
    %v268 = vpop.f32.mrb[0].mxu0
    %v269 = vadd.f32 %v200, %v268
    %v270 = vpop.f32.mrb[0].mxu0
    %271 = vdwg.mxu0
    %v272 = vmax.f32 %v269, 0.0
    %v273 = vld [vmem:[#allocation9] sm:$0xff]
    %v274 = vld [vmem:[#allocation9 + $0x8] sm:$0xff]
    %v275 = vld [vmem:[#allocation9 + $0x10] sm:$0xff]
    %v276 = vld [vmem:[#allocation9 + $0x18] sm:$0xff]
    %v277 = vld [vmem:[#allocation9 + $0x20] sm:$0xff]
    %v278 = vld [vmem:[#allocation9 + $0x28] sm:$0xff]
    %v279 = vld [vmem:[#allocation9 + $0x30] sm:$0xff]
    %v280 = vld [vmem:[#allocation9 + $0x38] sm:$0xff]
    %v281 = vld [vmem:[#allocation9 + $0x40] sm:$0xff]
    %v282 = vld [vmem:[#allocation9 + $0x48] sm:$0xff]
    %v283 = vld [vmem:[#allocation9 + $0x50] sm:$0xff]
    %v284 = vld [vmem:[#allocation9 + $0x58] sm:$0xff]
    %v285 = vld [vmem:[#allocation9 + $0x60] sm:$0xff]
    %v286 = vld [vmem:[#allocation9 + $0x68] sm:$0xff]
    %v287 = vld [vmem:[#allocation9 + $0x70] sm:$0xff]
    %v288 = vld [vmem:[#allocation9 + $0x78] sm:$0xff]
    %v289 = vld [vmem:[%s7] sm:$0x1]
    %v291 = vlaneseq
    %v292 = vshrl.u32 %v291, 7
    %v293 = vsub.s32 0, %v292
    %v294 = vrot.slane %v289, %v293
    %296 = vmatprep.subr.mxu0 0.0
    %297 = vmatpush1.msra.mxu0 %v273
    %298 = vmatprep.subr.mxu0 0.0
    %299 = vmatpush1.msra.mxu0 %v274
    %300 = vmatprep.subr.mxu0 0.0
    %301 = vmatpush1.msra.mxu0 %v275
    %302 = vmatprep.subr.mxu0 0.0
    %303 = vmatpush1.msra.mxu0 %v276
    %304 = vmatprep.subr.mxu0 0.0
    %305 = vmatpush1.msra.mxu0 %v277
    %306 = vmatprep.subr.mxu0 0.0
    %307 = vmatpush1.msra.mxu0 %v278
    %308 = vmatprep.subr.mxu0 0.0
    %309 = vmatpush1.msra.mxu0 %v279
    %310 = vmatprep.subr.mxu0 0.0
    %311 = vmatpush1.msra.mxu0 %v280
    %312 = vmatprep.subr.mxu0 0.0
    %313 = vmatpush1.msra.mxu0 %v281
    %314 = vmatprep.subr.mxu0 0.0
    %315 = vmatpush1.msra.mxu0 %v282
    %316 = vmatprep.subr.mxu0 0.0
    %317 = vmatpush1.msra.mxu0 %v283
    %318 = vmatprep.subr.mxu0 0.0
    %319 = vmatpush1.msra.mxu0 %v284
    %320 = vmatprep.subr.mxu0 0.0
    %321 = vmatpush1.msra.mxu0 %v285
    %322 = vmatprep.subr.mxu0 0.0
    %323 = vmatpush1.msra.mxu0 %v286
    %324 = vmatprep.subr.mxu0 0.0
    %325 = vmatpush1.msra.mxu0 %v287
    %326 = vmatprep.subr.mxu0 0.0
    %327 = vmatpush1.msra.mxu0 %v288
    %328 = vmatprep.subr.mxu0 0.0
    %329 = vmatpush1.msra.mxu0 0.0
    %330 = vmatprep.subr.mxu0 0.0
    %331 = vmatpush1.msra.mxu0 0.0
    %332 = vmatprep.subr.mxu0 0.0
    %333 = vmatpush1.msra.mxu0 0.0
    %334 = vmatprep.subr.mxu0 0.0
    %335 = vmatpush1.msra.mxu0 0.0
    %336 = vmatprep.subr.mxu0 0.0
    %337 = vmatpush1.msra.mxu0 0.0
    %338 = vmatprep.subr.mxu0 0.0
    %339 = vmatpush1.msra.mxu0 0.0
    %340 = vmatprep.subr.mxu0 0.0
    %341 = vmatpush1.msra.mxu0 0.0
    %342 = vmatprep.subr.mxu0 0.0
    %343 = vmatpush1.msra.mxu0 0.0
    %344 = vmatprep.subr.mxu0 0.0
    %345 = vmatpush1.msra.mxu0 0.0
    %346 = vmatprep.subr.mxu0 0.0
    %347 = vmatpush1.msra.mxu0 0.0
    %348 = vmatprep.subr.mxu0 0.0
    %349 = vmatpush1.msra.mxu0 0.0
    %350 = vmatprep.subr.mxu0 0.0
    %351 = vmatpush1.msra.mxu0 0.0
    %352 = vmatprep.subr.mxu0 0.0
    %353 = vmatpush1.msra.mxu0 0.0
    %354 = vmatprep.subr.mxu0 0.0
    %355 = vmatpush1.msra.mxu0 0.0
    %356 = vmatprep.subr.mxu0 0.0
    %357 = vmatpush1.msra.mxu0 0.0
    %358 = vmatprep.subr.mxu0 0.0
    %359 = vmatpush1.msra.mxu0 0.0
    %360 = vmatprep.mubr.f32.mxu0 0.0
    %361 = vmatmul.mubr.f32.gmra.mrb[0].mxu0 %v272
    %v362 = vpop.f32.mrb[0].mxu0
    %v363 = vadd.f32 %v294, %v362
    %v364 = vpop.f32.mrb[0].mxu0
    %365 = vdwg.mxu0
    %366 = vst [vmem:[#allocation11] sm:$0xff] %v363
    // Predicated region
    $region50: #{tpu_custom_call.1} parent=1 // pred_check
      _
    $region51: #{tpu_custom_call.1} parent=1 // pred_check_branch
      %368 = sbr.rel (0) target = $region53
    $region52: #{tpu_custom_call.1} parent=1 // pred_region
      %s370 = ssub.s32 128, 128
      %371 = vsyncadd [#allocation5], %s370
      %s373 = sshll.u32 [#allocation11], 4
      %s374 = int_to_ptr.vmem [resolvable:$true] %s373
      %376 = dma.vmem_to_hbm [thread:$0]  %s374, 128, %s8, [#allocation5]
    $region53: #{tpu_custom_call.1} parent=1 // pred_fallthru
      _
    // Predicated region
    $region54: #{tpu_custom_call.1} parent=1 // pred_check
      _
    $region55: #{tpu_custom_call.1} parent=1 // pred_check_branch
      %378 = sbr.rel (0) target = $region57
    $region56: #{tpu_custom_call.1} parent=1 // pred_region
      %379 = dma.done [#allocation5], 128
    $region57: #{tpu_custom_call.1} parent=1 // pred_fallthru
      _
    %380 = vsyncpa [#allocation4], 1
    %381 = vsyncpa [#allocation7], 1
    %382 = vsyncpa [#allocation10], 1
    %383 = vsyncpa [#allocation5], 1

</llo_original>
